<compile_context>
chip_gen: v6e
topology: v6e:2x2x1
jax: 0.10.0
libtpu: 0.0.40
codegen_flags: <defaults>
</compile_context>

<pallas_src>
import functools

import numpy as np
import jax
import jax.numpy as jnp
from jax.experimental import pallas as pl
from jax.experimental.pallas import tpu as pltpu

NUM_CLASSES = 7


def build_norm_d(balance: str = "equal") -> np.ndarray:
    """Deterministic reimplementation of EmotionDistanceLoss.__init__."""
    aspect_weight = [1, 1, 1]
    if balance != "equal":
        table = {
            "v": [2.8, 0.1, 0.1], "e": [0.1, 2.8, 0.1], "c": [0.1, 0.1, 2.8],
            "v-e": [1.4, 1.4, 0.2], "v-c": [1.4, 0.2, 1.4], "e-c": [0.2, 1.4, 1.4],
            "v-e-c": [1.5, 1, 0.5], "v-c-e": [1.5, 0.5, 1],
            "e-v-c": [1, 1.5, 0.5], "e-c-v": [0.5, 1.5, 1],
            "c-v-e": [1, 0.5, 1.5], "c-e-v": [0.5, 1, 1.5],
        }
        aspect_weight = table.get(balance, aspect_weight)
    aspect_distance = [
        [[0, 0, 0], [1, 0.5, 0], [1, 0.5, 0], [1, 0.5, 0], [1, 0.5, 1], [1, 0.5, 0], [1, 0.5, 0]],
        [[1, 0.5, 0], [0, 0, 0], [0, 1, 0], [0, 1, 0], [0, 1, 1], [2, 0, 0], [2, 1, 0]],
        [[1, 0.5, 0], [0, 1, 0], [0, 0, 0], [0, 1, 0], [0, 0, 1], [2, 1, 0], [2, 0, 0]],
        [[1, 0.5, 0], [0, 1, 0], [0, 1, 0], [0, 0, 0], [0, 1, 1], [2, 1, 0], [2, 1, 0]],
        [[1, 0.5, 1], [0, 1, 1], [0, 0, 1], [0, 1, 1], [0, 0, 0], [2, 1, 1], [2, 0, 1]],
        [[1, 0.5, 0], [2, 0, 0], [2, 1, 0], [2, 1, 0], [2, 1, 1], [0, 0, 0], [0, 1, 0]],
        [[1, 0.5, 0], [2, 1, 0], [2, 0, 0], [2, 1, 0], [2, 0, 1], [0, 1, 0], [0, 0, 0]],
    ]
    distance = np.zeros([7, 7])
    for row in range(7):
        for col in range(7):
            distance[row][col] = np.dot(aspect_weight, aspect_distance[row][col])
    return np.log(distance + 1.0).astype(np.float32)


def _round_up(x: int, m: int) -> int:
    return ((x + m - 1) // m) * m


def _edl_kernel(logits_ref, labels_ref, normdT_ref, out_ref, acc_ref,
                *, batch_size: int):
    """One grid step over a (7, tile_b) slab of transposed logits."""
    i = pl.program_id(0)

    @pl.when(i == 0)
    def _init():
        acc_ref[0] = 0.0   # S1 = sum(weights * comp_logprob)
        acc_ref[1] = 0.0   # S2 = sum(weights)

    logits = logits_ref[...]            # (7, TB) f32, classes on sublanes
    labels = labels_ref[...]            # (1, TB) int32 (padded columns hold -1)
    norm_d_t = normdT_ref[...]          # (7, 7) f32, norm_d_t[c, l] = norm_d[l, c]

    # softmax over classes (sublane axis), kept in exp/sum form:
    #   comp_logprob = log(1 - e/s) = log(s - e) - log(s)
    m = jnp.max(logits, axis=0, keepdims=True)       # (1, TB)  XLU
    e = jnp.exp(logits - m)                           # (7, TB)  EUP
    s = jnp.sum(e, axis=0, keepdims=True)             # (1, TB)  XLU
    comp_logprob = jnp.log(s - e) - jnp.log(s)        # (7, TB)  EUP

    # weights[c, b] = norm_d[labels[b], c] via 7 VPU select-fmas (no MXU, no
    # one-hot tensor).  Padded batch columns have label == -1 -> weight 0, so
    # they drop out of both accumulators without any extra masking.
    w = jnp.zeros_like(logits)
    for l in range(NUM_CLASSES):
        sel = (labels == l).astype(jnp.float32)       # (1, TB)
        w = w + sel * norm_d_t[:, l:l + 1]            # broadcast (7,1)*(1,TB)

    acc_ref[0] = acc_ref[0] + jnp.sum(w * comp_logprob)
    acc_ref[1] = acc_ref[1] + jnp.sum(w)

    @pl.when(i == pl.num_programs(0) - 1)
    def _finalize():
        # mean_i[-(row_sum_i / total_w) / 6] == -S1 / (S2 * 6 * B)
        out_ref[0, 0] = -acc_ref[0] / (acc_ref[1] * (6.0 * batch_size))


def emotion_distance_loss(outputs: jax.Array, labels: jax.Array,
                          norm_d: jax.Array, *, tile_b: int | None = None) -> jax.Array:
    """outputs: (B, 7) float logits, labels: (B,) int, norm_d: (7, 7) float32."""
    B, C = outputs.shape
    assert C == NUM_CLASSES

    if tile_b is None:
        tile_b = _round_up(B, 128) if B <= 2048 else 2048
    tile_b = _round_up(tile_b, 128)
    B_pad = _round_up(B, tile_b)
    grid = (B_pad // tile_b,)

    # lane-dense layout: classes on sublanes, batch on lanes.
    # logits padded with 0 (softmax stays finite there); labels padded with -1
    # so padded columns contribute zero weight in the kernel.
    logits_t = jnp.pad(outputs.astype(jnp.float32).T, ((0, 0), (0, B_pad - B)))
    labels_row = jnp.pad(labels.astype(jnp.int32).reshape(1, B),
                         ((0, 0), (0, B_pad - B)), constant_values=-1)
    norm_d_t = jnp.asarray(norm_d, jnp.float32).T      # (c, l)

    kernel = functools.partial(_edl_kernel, batch_size=B)

    out = pl.pallas_call(
        kernel,
        out_shape=jax.ShapeDtypeStruct((1, 1), jnp.float32),
        grid=grid,
        in_specs=[
            pl.BlockSpec((C, tile_b), lambda i: (0, i)),
            pl.BlockSpec((1, tile_b), lambda i: (0, i)),
            pl.BlockSpec((C, C), lambda i: (0, 0)),      # constant table, stays resident
        ],
        out_specs=pl.BlockSpec((1, 1), lambda i: (0, 0),
                               memory_space=pltpu.MemorySpace.SMEM),
        scratch_shapes=[pltpu.SMEM((2,), jnp.float32)],
        compiler_params=pltpu.CompilerParams(
            dimension_semantics=("arbitrary",),          # global-sum accumulator axis
        ),
        cost_estimate=pl.CostEstimate(
            flops=70 * B_pad,
            transcendentals=15 * B_pad,
            bytes_accessed=(NUM_CLASSES + 1) * 4 * B_pad,
        ),
    )(logits_t, labels_row, norm_d_t)
    return out[0, 0]


def _reference(outputs, labels, norm_d):
    prob = jax.nn.softmax(outputs.astype(jnp.float32), axis=1)
    comp_logprob = jnp.log(1.0 - prob)
    onehots = jax.nn.one_hot(labels, NUM_CLASSES, dtype=jnp.float32)
    weights = onehots @ norm_d
    loss = -(jnp.sum(weights * comp_logprob, axis=-1) / jnp.sum(weights)) / 6.0
    return jnp.mean(loss)


if __name__ == "__main__":
    norm_d = jnp.asarray(build_norm_d("equal"))
    key = jax.random.PRNGKey(0)

    # Small shape consistent with the module (B=8, 7 emotion classes).
    B = 8
    k_logits, k_labels, key = jax.random.split(key, 3)
    logits = jax.random.normal(k_logits, (B, NUM_CLASSES), dtype=jnp.float32)
    labels = jax.random.randint(k_labels, (B,), 0, NUM_CLASSES, dtype=jnp.int32)

    loss = emotion_distance_loss(logits, labels, norm_d)
    jax.block_until_ready(loss)
    ref = _reference(logits, labels, norm_d)
    assert np.allclose(np.asarray(loss), np.asarray(ref), rtol=1e-5, atol=1e-5), (
        f"mismatch: pallas={loss} ref={ref}")

    # Second check: non-multiple-of-128 batch with a forced small tile so the
    # grid has multiple steps (exercises -1 label padding + cross-step accumulators).
    B2 = 200
    k_logits2, k_labels2, key = jax.random.split(key, 3)
    logits2 = jax.random.normal(k_logits2, (B2, NUM_CLASSES), dtype=jnp.float32)
    labels2 = jax.random.randint(k_labels2, (B2,), 0, NUM_CLASSES, dtype=jnp.int32)

    loss2 = emotion_distance_loss(logits2, labels2, norm_d, tile_b=128)
    jax.block_until_ready(loss2)
    ref2 = _reference(logits2, labels2, norm_d)
    assert np.allclose(np.asarray(loss2), np.asarray(ref2), rtol=1e-5, atol=1e-5), (
        f"mismatch (tiled): pallas={loss2} ref={ref2}")

    print("KERNEL_OK")
</pallas_src>

<mosaic_0001>
module attributes {stable_mosaic.version = 11 : i64} {
  func.func @_edl_kernel(%arg0: i32, %arg1: memref<7x128xf32, #tpu.memory_space<vmem>>, %arg2: memref<1x128xi32, #tpu.memory_space<vmem>>, %arg3: memref<7x7xf32, #tpu.memory_space<vmem>>, %arg4: memref<1x1xf32, #tpu.memory_space<smem>>, %arg5: memref<2xf32, #tpu.memory_space<smem>>) attributes {dimension_semantics = [#tpu.dimension_semantics<arbitrary>], iteration_bounds = array<i64: 1>, scalar_prefetch = 0 : i64, scratch_operands = 1 : i64, tpu.core_type = #tpu.core_type<tc>, window_params = [{transform_indices = @transform_0, window_bounds = array<i64: 7, 128>}, {transform_indices = @transform_1, window_bounds = array<i64: 1, 128>}, {pipeline_mode = #tpu.pipeline_mode<synchronous>, transform_indices = @transform_2, window_bounds = array<i64: 7, 7>}, {transform_indices = @transform_3, window_bounds = array<i64: 1, 1>}]} {
    %c0_i32 = arith.constant 0 : i32
    %0 = arith.cmpi eq, %arg0, %c0_i32 : i32
    %1 = arith.extui %0 : i1 to i32
    %c0_i32_0 = arith.constant 0 : i32
    %2 = arith.cmpi ne, %1, %c0_i32_0 : i32
    scf.if %2 {
      %cst_16 = arith.constant 0.000000e+00 : f32
      %c0_17 = arith.constant 0 : index
      %101 = memref.load %arg5[%c0_17] : memref<2xf32, #tpu.memory_space<smem>>
      memref.store %cst_16, %arg5[%c0_17] : memref<2xf32, #tpu.memory_space<smem>>
      %cst_18 = arith.constant 0.000000e+00 : f32
      %c1_19 = arith.constant 1 : index
      %102 = memref.load %arg5[%c1_19] : memref<2xf32, #tpu.memory_space<smem>>
      memref.store %cst_18, %arg5[%c1_19] : memref<2xf32, #tpu.memory_space<smem>>
    } else {
    }
    %c0 = arith.constant 0 : index
    %c0_1 = arith.constant 0 : index
    %3 = vector.load %arg1[%c0, %c0_1] : memref<7x128xf32, #tpu.memory_space<vmem>>, vector<7x128xf32>
    %c0_2 = arith.constant 0 : index
    %c0_3 = arith.constant 0 : index
    %4 = vector.load %arg2[%c0_2, %c0_3] : memref<1x128xi32, #tpu.memory_space<vmem>>, vector<1x128xi32>
    %c0_4 = arith.constant 0 : index
    %c0_5 = arith.constant 0 : index
    %5 = vector.load %arg3[%c0_4, %c0_5] : memref<7x7xf32, #tpu.memory_space<vmem>>, vector<7x7xf32>
    %cst = arith.constant dense<0xFF800000> : vector<128xf32>
    %6 = vector.multi_reduction <maximumf>, %3, %cst [0] : vector<7x128xf32> to vector<128xf32>
    %7 = vector.shape_cast %6 : vector<128xf32> to vector<1x128xf32>
    %8 = vector.broadcast %7 : vector<1x128xf32> to vector<7x128xf32>
    %9 = arith.subf %3, %8 : vector<7x128xf32>
    %10 = math.exp %9 : vector<7x128xf32>
    %cst_6 = arith.constant dense<0.000000e+00> : vector<128xf32>
    %11 = vector.multi_reduction <add>, %10, %cst_6 [0] : vector<7x128xf32> to vector<128xf32>
    %12 = vector.shape_cast %11 : vector<128xf32> to vector<1x128xf32>
    %13 = vector.broadcast %12 : vector<1x128xf32> to vector<7x128xf32>
    %14 = arith.subf %13, %10 : vector<7x128xf32>
    %15 = math.log %14 : vector<7x128xf32>
    %16 = math.log %12 : vector<1x128xf32>
    %17 = vector.broadcast %16 : vector<1x128xf32> to vector<7x128xf32>
    %18 = arith.subf %15, %17 : vector<7x128xf32>
    %cst_7 = arith.constant 0.000000e+00 : f32
    %19 = vector.broadcast %cst_7 : f32 to vector<7x128xf32>
    %c0_i32_8 = arith.constant 0 : i32
    %20 = vector.broadcast %c0_i32_8 : i32 to vector<1x128xi32>
    %21 = arith.cmpi eq, %4, %20 : vector<1x128xi32>
    %22 = arith.extui %21 : vector<1x128xi1> to vector<1x128xi32>
    %23 = arith.sitofp %22 : vector<1x128xi32> to vector<1x128xf32>
    %24 = vector.extract_strided_slice %5 {offsets = [0, 0], sizes = [7, 1], strides = [1, 1]} : vector<7x7xf32> to vector<7x1xf32>
    %25 = vector.broadcast %23 : vector<1x128xf32> to vector<7x128xf32>
    %26 = vector.broadcast %24 : vector<7x1xf32> to vector<7x128xf32>
    %27 = arith.mulf %25, %26 : vector<7x128xf32>
    %28 = arith.addf %19, %27 : vector<7x128xf32>
    %c1_i32 = arith.constant 1 : i32
    %29 = vector.broadcast %c1_i32 : i32 to vector<1x128xi32>
    %30 = arith.cmpi eq, %4, %29 : vector<1x128xi32>
    %31 = arith.extui %30 : vector<1x128xi1> to vector<1x128xi32>
    %32 = arith.sitofp %31 : vector<1x128xi32> to vector<1x128xf32>
    %33 = vector.extract_strided_slice %5 {offsets = [0, 1], sizes = [7, 1], strides = [1, 1]} : vector<7x7xf32> to vector<7x1xf32>
    %34 = vector.broadcast %32 : vector<1x128xf32> to vector<7x128xf32>
    %35 = vector.broadcast %33 : vector<7x1xf32> to vector<7x128xf32>
    %36 = arith.mulf %34, %35 : vector<7x128xf32>
    %37 = arith.addf %28, %36 : vector<7x128xf32>
    %c2_i32 = arith.constant 2 : i32
    %38 = vector.broadcast %c2_i32 : i32 to vector<1x128xi32>
    %39 = arith.cmpi eq, %4, %38 : vector<1x128xi32>
    %40 = arith.extui %39 : vector<1x128xi1> to vector<1x128xi32>
    %41 = arith.sitofp %40 : vector<1x128xi32> to vector<1x128xf32>
    %42 = vector.extract_strided_slice %5 {offsets = [0, 2], sizes = [7, 1], strides = [1, 1]} : vector<7x7xf32> to vector<7x1xf32>
    %43 = vector.broadcast %41 : vector<1x128xf32> to vector<7x128xf32>
    %44 = vector.broadcast %42 : vector<7x1xf32> to vector<7x128xf32>
    %45 = arith.mulf %43, %44 : vector<7x128xf32>
    %46 = arith.addf %37, %45 : vector<7x128xf32>
    %c3_i32 = arith.constant 3 : i32
    %47 = vector.broadcast %c3_i32 : i32 to vector<1x128xi32>
    %48 = arith.cmpi eq, %4, %47 : vector<1x128xi32>
    %49 = arith.extui %48 : vector<1x128xi1> to vector<1x128xi32>
    %50 = arith.sitofp %49 : vector<1x128xi32> to vector<1x128xf32>
    %51 = vector.extract_strided_slice %5 {offsets = [0, 3], sizes = [7, 1], strides = [1, 1]} : vector<7x7xf32> to vector<7x1xf32>
    %52 = vector.broadcast %50 : vector<1x128xf32> to vector<7x128xf32>
    %53 = vector.broadcast %51 : vector<7x1xf32> to vector<7x128xf32>
    %54 = arith.mulf %52, %53 : vector<7x128xf32>
    %55 = arith.addf %46, %54 : vector<7x128xf32>
    %c4_i32 = arith.constant 4 : i32
    %56 = vector.broadcast %c4_i32 : i32 to vector<1x128xi32>
    %57 = arith.cmpi eq, %4, %56 : vector<1x128xi32>
    %58 = arith.extui %57 : vector<1x128xi1> to vector<1x128xi32>
    %59 = arith.sitofp %58 : vector<1x128xi32> to vector<1x128xf32>
    %60 = vector.extract_strided_slice %5 {offsets = [0, 4], sizes = [7, 1], strides = [1, 1]} : vector<7x7xf32> to vector<7x1xf32>
    %61 = vector.broadcast %59 : vector<1x128xf32> to vector<7x128xf32>
    %62 = vector.broadcast %60 : vector<7x1xf32> to vector<7x128xf32>
    %63 = arith.mulf %61, %62 : vector<7x128xf32>
    %64 = arith.addf %55, %63 : vector<7x128xf32>
    %c5_i32 = arith.constant 5 : i32
    %65 = vector.broadcast %c5_i32 : i32 to vector<1x128xi32>
    %66 = arith.cmpi eq, %4, %65 : vector<1x128xi32>
    %67 = arith.extui %66 : vector<1x128xi1> to vector<1x128xi32>
    %68 = arith.sitofp %67 : vector<1x128xi32> to vector<1x128xf32>
    %69 = vector.extract_strided_slice %5 {offsets = [0, 5], sizes = [7, 1], strides = [1, 1]} : vector<7x7xf32> to vector<7x1xf32>
    %70 = vector.broadcast %68 : vector<1x128xf32> to vector<7x128xf32>
    %71 = vector.broadcast %69 : vector<7x1xf32> to vector<7x128xf32>
    %72 = arith.mulf %70, %71 : vector<7x128xf32>
    %73 = arith.addf %64, %72 : vector<7x128xf32>
    %c6_i32 = arith.constant 6 : i32
    %74 = vector.broadcast %c6_i32 : i32 to vector<1x128xi32>
    %75 = arith.cmpi eq, %4, %74 : vector<1x128xi32>
    %76 = arith.extui %75 : vector<1x128xi1> to vector<1x128xi32>
    %77 = arith.sitofp %76 : vector<1x128xi32> to vector<1x128xf32>
    %78 = vector.extract_strided_slice %5 {offsets = [0, 6], sizes = [7, 1], strides = [1, 1]} : vector<7x7xf32> to vector<7x1xf32>
    %79 = vector.broadcast %77 : vector<1x128xf32> to vector<7x128xf32>
    %80 = vector.broadcast %78 : vector<7x1xf32> to vector<7x128xf32>
    %81 = arith.mulf %79, %80 : vector<7x128xf32>
    %82 = arith.addf %73, %81 : vector<7x128xf32>
    %c0_9 = arith.constant 0 : index
    %83 = memref.load %arg5[%c0_9] : memref<2xf32, #tpu.memory_space<smem>>
    %84 = arith.mulf %82, %18 : vector<7x128xf32>
    %85 = vector.shape_cast %84 : vector<7x128xf32> to vector<1x7x128xf32>
    %cst_10 = arith.constant dense<0.000000e+00> : vector<1xf32>
    %86 = vector.multi_reduction <add>, %85, %cst_10 [1, 2] : vector<1x7x128xf32> to vector<1xf32>
    %87 = vector.shape_cast %86 : vector<1xf32> to vector<1x1x1xf32>
    %88 = vector.extract %87[0, 0, 0] : f32 from vector<1x1x1xf32>
    %89 = arith.addf %83, %88 : f32
    %c0_11 = arith.constant 0 : index
    %90 = memref.load %arg5[%c0_11] : memref<2xf32, #tpu.memory_space<smem>>
    memref.store %89, %arg5[%c0_11] : memref<2xf32, #tpu.memory_space<smem>>
    %c1 = arith.constant 1 : index
    %91 = memref.load %arg5[%c1] : memref<2xf32, #tpu.memory_space<smem>>
    %92 = vector.shape_cast %82 : vector<7x128xf32> to vector<1x7x128xf32>
    %cst_12 = arith.constant dense<0.000000e+00> : vector<1xf32>
    %93 = vector.multi_reduction <add>, %92, %cst_12 [1, 2] : vector<1x7x128xf32> to vector<1xf32>
    %94 = vector.shape_cast %93 : vector<1xf32> to vector<1x1x1xf32>
    %95 = vector.extract %94[0, 0, 0] : f32 from vector<1x1x1xf32>
    %96 = arith.addf %91, %95 : f32
    %c1_13 = arith.constant 1 : index
    %97 = memref.load %arg5[%c1_13] : memref<2xf32, #tpu.memory_space<smem>>
    memref.store %96, %arg5[%c1_13] : memref<2xf32, #tpu.memory_space<smem>>
    %c0_i32_14 = arith.constant 0 : i32
    %98 = arith.cmpi eq, %arg0, %c0_i32_14 : i32
    %99 = arith.extui %98 : i1 to i32
    %c0_i32_15 = arith.constant 0 : i32
    %100 = arith.cmpi ne, %99, %c0_i32_15 : i32
    scf.if %100 {
      %c0_16 = arith.constant 0 : index
      %101 = memref.load %arg5[%c0_16] : memref<2xf32, #tpu.memory_space<smem>>
      %cst_17 = arith.constant 0.000000e+00 : f32
      %102 = arith.subf %cst_17, %101 : f32
      %c1_18 = arith.constant 1 : index
      %103 = memref.load %arg5[%c1_18] : memref<2xf32, #tpu.memory_space<smem>>
      %cst_19 = arith.constant 4.800000e+01 : f32
      %104 = arith.mulf %103, %cst_19 : f32
      %105 = arith.divf %102, %104 : f32
      %c0_20 = arith.constant 0 : index
      %c0_21 = arith.constant 0 : index
      %106 = memref.load %arg4[%c0_20, %c0_21] : memref<1x1xf32, #tpu.memory_space<smem>>
      memref.store %105, %arg4[%c0_20, %c0_21] : memref<1x1xf32, #tpu.memory_space<smem>>
    } else {
    }
    return
  }
  func.func @transform_0(%arg0: i32) -> (i32, i32) {
    %c0_i32 = arith.constant 0 : i32
    %c0_i32_0 = arith.constant 0 : i32
    return %c0_i32, %arg0 : i32, i32
  }
  func.func @transform_1(%arg0: i32) -> (i32, i32) {
    %c0_i32 = arith.constant 0 : i32
    %c0_i32_0 = arith.constant 0 : i32
    return %c0_i32, %arg0 : i32, i32
  }
  func.func @transform_2(%arg0: i32) -> (i32, i32) {
    %c0_i32 = arith.constant 0 : i32
    %c0_i32_0 = arith.constant 0 : i32
    %c0_i32_1 = arith.constant 0 : i32
    return %c0_i32, %c0_i32_0 : i32, i32
  }
  func.func @transform_3(%arg0: i32) -> (i32, i32) {
    %c0_i32 = arith.constant 0 : i32
    %c0_i32_0 = arith.constant 0 : i32
    %c0_i32_1 = arith.constant 0 : i32
    return %c0_i32, %c0_i32_0 : i32, i32
  }
}

</mosaic_0001>

<llo_original>
// kernel: tpu_custom_call.1
$region0: #{tpu_custom_call.1}
  #allocation0 [shape = 'u32[]', space=smem, size = 0x4, offset = 0x4, fixed_abs, tag = 'smem constant byte address 0x4 - core index']
  #allocation1 [shape = 'u32[144,128]{1,0:T(1,128)}', space=vmem, size = 0x12000, scoped, tag = 'internal scratch']
  #allocation2 [shape = 'f32[2]{0:T(128)}', space=smem, size = 0x200, scoped, tag = 'scratch operand']
  %s0 = inlined_call_operand.hbm [shape: f32[7,128], index: 0, kind: input, shape index: {}]
  %s1 = inlined_call_operand.vmem [shape: s32[1,128], index: 1, kind: input, shape index: {}]
  %s2 = inlined_call_operand.hbm [shape: f32[7,7], index: 2, kind: input, shape index: {}]
  %s3 = inlined_call_operand.hbm [shape: f32[1,1], index: 3, kind: output, shape index: {}]
  %s4 = sld [smem:[#allocation0]]
  $region38: #{tpu_custom_call.1} parent=0
    _
  %s6 = ssub.s32 1, %s4
  %s7 = scalar_select 0, %s6, %s4
  $region1: #{tpu_custom_call.1} parent=0
    #allocation3 [shape = 'u8[4096]{0}', space=vmem, size = 0x1000, scoped, tag = 'input window, operand 0, single buffered']
    #allocation4 [shape = 's32[1]{0}', space=sflag, size = 0x4, scoped, tag = 'scoped memory for tpu_custom_call.1']
    #allocation5 [shape = 's32[1]{0}', space=sflag, size = 0x4, scoped, tag = 'scoped memory for tpu_custom_call.1']
    #allocation6 [shape = 'u8[4096]{0}', space=vmem, size = 0x1000, scoped, tag = 'input window, operand 2, single buffered']
    #allocation7 [shape = 's32[1]{0}', space=sflag, size = 0x4, scoped, tag = 'scoped memory for tpu_custom_call.1']
    #allocation8 [shape = 'u8[512]{0}', space=smem, size = 0x200, scoped, tag = 'output window, operand 0, single buffered']
    %8 = vsyncpa [#allocation4], 0
    %9 = vsyncpa [#allocation7], 0
    %10 = vsyncpa [#allocation5], 0
    // Predicated region
    $region2: #{tpu_custom_call.1} parent=1 // pred_check
      _
    $region3: #{tpu_custom_call.1} parent=1 // pred_check_branch
      %12 = sbr.rel (0) target = $region5
    $region4: #{tpu_custom_call.1} parent=1 // pred_region
      %s14 = ssub.s32 128, 128
      %15 = vsyncadd [#allocation4], %s14
      %s17 = sshll.u32 [#allocation3], 4
      %s18 = int_to_ptr.vmem [resolvable:$true] %s17
      %20 = dma.hbm_to_vmem [thread:$0]  %s0, 128, %s18, [#allocation4]
    $region5: #{tpu_custom_call.1} parent=1 // pred_fallthru
      _
    // Predicated region
    $region6: #{tpu_custom_call.1} parent=1 // pred_check
      _
    $region7: #{tpu_custom_call.1} parent=1 // pred_check_branch
      %22 = sbr.rel (0) target = $region9
    $region8: #{tpu_custom_call.1} parent=1 // pred_region
      _
    $region9: #{tpu_custom_call.1} parent=1 // pred_fallthru
      _
    // Predicated region
    $region10: #{tpu_custom_call.1} parent=1 // pred_check
      _
    $region11: #{tpu_custom_call.1} parent=1 // pred_check_branch
      %24 = sbr.rel (0) target = $region13
    $region12: #{tpu_custom_call.1} parent=1 // pred_region
      %s26 = ssub.s32 128, 128
      %27 = vsyncadd [#allocation7], %s26
      %s29 = sshll.u32 [#allocation6], 4
      %s30 = int_to_ptr.vmem [resolvable:$true] %s29
      %32 = dma.hbm_to_vmem [thread:$0]  %s2, 128, %s30, [#allocation7]
    $region13: #{tpu_custom_call.1} parent=1 // pred_fallthru
      _
    // Predicated region
    $region14: #{tpu_custom_call.1} parent=1 // pred_check
      _
    $region15: #{tpu_custom_call.1} parent=1 // pred_check_branch
      %34 = sbr.rel (0) target = $region17
    $region16: #{tpu_custom_call.1} parent=1 // pred_region
      %35 = dma.done [#allocation4], 128
    $region17: #{tpu_custom_call.1} parent=1 // pred_fallthru
      _
    // Predicated region
    $region18: #{tpu_custom_call.1} parent=1 // pred_check
      _
    $region19: #{tpu_custom_call.1} parent=1 // pred_check_branch
      %37 = sbr.rel (0) target = $region21
    $region20: #{tpu_custom_call.1} parent=1 // pred_region
      %38 = dma.done [#allocation7], 128
    $region21: #{tpu_custom_call.1} parent=1 // pred_fallthru
      _
    %p39 = scmp.eq.s32.totalorder 0, 0
    // Predicated region
    $region22: #{tpu_custom_call.1} parent=1 // pred_check
      %p40 = pneg %p39
    $region23: #{tpu_custom_call.1} parent=1 // pred_check_branch
      %42 = sbr.rel (%p40) target = $region25
    $region24: #{tpu_custom_call.1} parent=1 // pred_region
      %s43 = scalar_lea.smem [#allocation2], 0
      %44 = sst [smem:[%s43]] 0.0
      %s45 = scalar_lea.smem [#allocation2], 1
      %46 = sst [smem:[%s45]] 0.0
    $region25: #{tpu_custom_call.1} parent=1 // pred_fallthru
      _
    %v47 = vld [vmem:[#allocation3] sm:$0x7f]
    %v48 = vld [vmem:[%s1] sm:$0x1]
    %v49 = vld [vmem:[#allocation6] sm:$0x7f]
    %vm50 = vcmask 1046528
    %v51 = vsel %vm50, %v47, -inf
    %v52 = vrot.slane %v51, 4
    %v53 = vmax.f32 %v51, %v52
    %v54 = vrot.slane %v53, 2
    %v55 = vmax.f32 %v53, %v54
    %v56 = vrot.slane %v55, 1
    %v57 = vmax.f32 %v55, %v56
    %v58 = vsub.f32 %v47, %v57
    %v59 = vmul.f32 %v58, 1.442695
    %v60 = vpow.pop %v59
    %v61 = vsel %vm50, %v60, 0.0
    %v62 = vrot.slane %v61, 4
    %v63 = vadd.f32 %v61, %v62
    %v64 = vrot.slane %v63, 2
    %v65 = vadd.f32 %v63, %v64
    %v66 = vrot.slane %v65, 1
    %v67 = vadd.f32 %v65, %v66
    %v68 = vsub.f32 %v67, %v60
    %v69 = vlog2.pop %v68
    %v70 = vmul.f32 %v69, 0.6931472
    %v71 = vlog2.pop %v67
    %v72 = vmul.f32 %v71, 0.6931472
    %v73 = vsub.f32 %v70, %v72
    %vm74 = vcmp.eq.s32.totalorder %v48, 0
    %v75 = vsel %vm74, 1, 0
    %v76 = vcvt.s32.f32 %v75
    %v78 = vlaneseq
    %v79 = vshrl.u32 %v78, 7
    %v80 = vsub.s32 0, %v79
    %v81 = vrot.slane %v76, %v80
    %84 = vset.pattern.permute.xlu0 0
    %85 = vperm.xlu0 %84, %v49
    %v86 = vpop.permute.xlu0 %85
    %v88 = vmul.f32 %v81, %v86
    %v89 = vadd.f32 %v88, 0.0
    %vm90 = vcmp.eq.s32.totalorder %v48, 1
    %v91 = vsel %vm90, 1, 0
    %v92 = vcvt.s32.f32 %v91
    %v94 = vlaneseq
    %v95 = vshrl.u32 %v94, 7
    %v96 = vsub.s32 0, %v95
    %v97 = vrot.slane %v92, %v96
    %99 = vset.pattern.permute.xlu0 1
    %100 = vperm.xlu0 %99, %v49
    %v101 = vpop.permute.xlu0 %100
    %v103 = vmul.f32 %v97, %v101
    %v104 = vadd.f32 %v89, %v103
    %vm105 = vcmp.eq.s32.totalorder %v48, 2
    %v106 = vsel %vm105, 1, 0
    %v107 = vcvt.s32.f32 %v106
    %v109 = vlaneseq
    %v110 = vshrl.u32 %v109, 7
    %v111 = vsub.s32 0, %v110
    %v112 = vrot.slane %v107, %v111
    %114 = vset.pattern.permute.xlu0 2
    %115 = vperm.xlu0 %114, %v49
    %v116 = vpop.permute.xlu0 %115
    %v118 = vmul.f32 %v112, %v116
    %v119 = vadd.f32 %v104, %v118
    %vm120 = vcmp.eq.s32.totalorder %v48, 3
    %v121 = vsel %vm120, 1, 0
    %v122 = vcvt.s32.f32 %v121
    %v124 = vlaneseq
    %v125 = vshrl.u32 %v124, 7
    %v126 = vsub.s32 0, %v125
    %v127 = vrot.slane %v122, %v126
    %129 = vset.pattern.permute.xlu0 3
    %130 = vperm.xlu0 %129, %v49
    %v131 = vpop.permute.xlu0 %130
    %v133 = vmul.f32 %v127, %v131
    %v134 = vadd.f32 %v119, %v133
    %vm135 = vcmp.eq.s32.totalorder %v48, 4
    %v136 = vsel %vm135, 1, 0
    %v137 = vcvt.s32.f32 %v136
    %v139 = vlaneseq
    %v140 = vshrl.u32 %v139, 7
    %v141 = vsub.s32 0, %v140
    %v142 = vrot.slane %v137, %v141
    %144 = vset.pattern.permute.xlu0 4
    %145 = vperm.xlu0 %144, %v49
    %v146 = vpop.permute.xlu0 %145
    %v148 = vmul.f32 %v142, %v146
    %v149 = vadd.f32 %v134, %v148
    %vm150 = vcmp.eq.s32.totalorder %v48, 5
    %v151 = vsel %vm150, 1, 0
    %v152 = vcvt.s32.f32 %v151
    %v154 = vlaneseq
    %v155 = vshrl.u32 %v154, 7
    %v156 = vsub.s32 0, %v155
    %v157 = vrot.slane %v152, %v156
    %159 = vset.pattern.permute.xlu0 5
    %160 = vperm.xlu0 %159, %v49
    %v161 = vpop.permute.xlu0 %160
    %v163 = vmul.f32 %v157, %v161
    %v164 = vadd.f32 %v149, %v163
    %vm165 = vcmp.eq.s32.totalorder %v48, 6
    %v166 = vsel %vm165, 1, 0
    %v167 = vcvt.s32.f32 %v166
    %v169 = vlaneseq
    %v170 = vshrl.u32 %v169, 7
    %v171 = vsub.s32 0, %v170
    %v172 = vrot.slane %v167, %v171
    %174 = vset.pattern.permute.xlu0 6
    %175 = vperm.xlu0 %174, %v49
    %v176 = vpop.permute.xlu0 %175
    %v178 = vmul.f32 %v172, %v176
    %v179 = vadd.f32 %v164, %v178
    %s180 = sld [smem:[#allocation2]]
    %v181 = vmul.f32 %v179, %v73
    %v182 = vsel %vm50, %v181, 0.0
    %183 = vadd.xlane.f32.xlu0 %v182
    %v184 = vpop.xlane.xlu0 %183
    %v185 = vrot.slane %v184, 4
    %v186 = vadd.f32 %v184, %v185
    %v187 = vrot.slane %v186, 2
    %v188 = vadd.f32 %v186, %v187
    %v189 = vrot.slane %v188, 1
    %v190 = vadd.f32 %v188, %v189
    %s191 = vtos %v190
    %s192 = sadd.f32 %s180, %s191
    %s193 = scalar_lea.smem [#allocation2], 0
    %194 = sst [smem:[%s193]] %s192
    %s195 = sld [smem:[#allocation2 + $0x1]]
    %v196 = vsel %vm50, %v179, 0.0
    %197 = vadd.xlane.f32.xlu0 %v196
    %v198 = vpop.xlane.xlu0 %197
    %v199 = vrot.slane %v198, 4
    %v200 = vadd.f32 %v198, %v199
    %v201 = vrot.slane %v200, 2
    %v202 = vadd.f32 %v200, %v201
    %v203 = vrot.slane %v202, 1
    %v204 = vadd.f32 %v202, %v203
    %s205 = vtos %v204
    %s206 = sadd.f32 %s195, %s205
    %s207 = scalar_lea.smem [#allocation2], 1
    %208 = sst [smem:[%s207]] %s206
    // Predicated region
    $region26: #{tpu_custom_call.1} parent=1 // pred_check
      %p209 = pneg %p39
    $region27: #{tpu_custom_call.1} parent=1 // pred_check_branch
      %211 = sbr.rel (%p209) target = $region29
    $region28: #{tpu_custom_call.1} parent=1 // pred_region
      %s212 = sld [smem:[#allocation2]]
      %s213 = ssub.f32 0.0, %s212
      %s214 = sld [smem:[#allocation2 + $0x1]]
      %s215 = smul.f32 %s214, 48.0
      %v216 = vstv %s215
      %v217 = vrcp.pop %v216
      %s218 = vtos %v217
      %s219 = smul.f32 %s213, %s218
      %s220 = scalar_lea.smem [#allocation8], 0
      %221 = sst [smem:[%s220]] %s219
    $region29: #{tpu_custom_call.1} parent=1 // pred_fallthru
      _
    // Predicated region
    $region30: #{tpu_custom_call.1} parent=1 // pred_check
      _
    $region31: #{tpu_custom_call.1} parent=1 // pred_check_branch
      %223 = sbr.rel (0) target = $region33
    $region32: #{tpu_custom_call.1} parent=1 // pred_region
      %s225 = ssub.s32 16, 16
      %226 = vsyncadd [#allocation5], %s225
      %229 = dma.smem_to_hbm [#allocation8], 16, %s3, [#allocation5]
    $region33: #{tpu_custom_call.1} parent=1 // pred_fallthru
      _
    // Predicated region
    $region34: #{tpu_custom_call.1} parent=1 // pred_check
      _
    $region35: #{tpu_custom_call.1} parent=1 // pred_check_branch
      %231 = sbr.rel (0) target = $region37
    $region36: #{tpu_custom_call.1} parent=1 // pred_region
      %232 = dma.done [#allocation5], 16
    $region37: #{tpu_custom_call.1} parent=1 // pred_fallthru
      _
    %233 = sfence
    %234 = vsyncpa [#allocation4], 1
    %235 = vsyncpa [#allocation7], 1
    %236 = vsyncpa [#allocation5], 1

</llo_original>
